<compile_context>
chip_gen: v5e
topology: v5e:2x2
jax: 0.10.0
libtpu: 0.0.40
codegen_flags: <defaults>
</compile_context>

<pallas_src>
import jax
import jax.numpy as jnp
from jax.experimental import pallas as pl
from jax.experimental.pallas import tpu as pltpu


def make_sine_pe(attn_size: int, sample: int = 128) -> jnp.ndarray:
    """Deterministic 'sine' positional encoding, identical to the PyTorch init.

    pe[:, 0::2] = sin(position * div_term), pe[:, 1::2] = cos(position * div_term).
    Handles odd attn_size by truncating the trailing cos column (the PyTorch
    reference only supports even attn_size; for even sizes this is bit-identical
    to it).
    """
    position = jnp.arange(sample, dtype=jnp.float32)[:, None]              # (S, 1)
    div_term = jnp.exp(
        jnp.arange(0, attn_size, 2, dtype=jnp.float32)
        * (-9.210340371976184 / attn_size)                                 # -ln(10000)/D
    )                                                                      # (ceil(D/2),)
    angles = position * div_term                                           # (S, ceil(D/2))
    pe = jnp.stack([jnp.sin(angles), jnp.cos(angles)], axis=-1)            # (S, ceil(D/2), 2)
    pe = pe.reshape(sample, -1)[:, :attn_size]                             # (S, D)
    return pe[None, :, :]                                                  # (1, S, D)


def _add_pe_kernel(x_ref, pe_ref, o_ref):
    # (tb, L) + (1, L) broadcast add; pe block is resident in VMEM (constant
    # block index), x/o blocks stream per grid step.
    o_ref[...] = x_ref[...] + pe_ref[...]


def _pick_row_block(n_rows: int, n_lanes: int, itemsize: int) -> int:
    """Rows per block: whole array if small, else a multiple-of-8 divisor of
    n_rows under a ~4 MiB per-buffer budget (fits double-buffering on all of
    v5e / v6e / v7x default scoped VMEM)."""
    budget = 4 * 1024 * 1024
    if n_rows * n_lanes * itemsize <= budget:
        return n_rows
    max_rows = max(8, budget // (n_lanes * itemsize))
    tb = min(n_rows, (max_rows // 8) * 8)
    while tb >= 8:
        if n_rows % tb == 0:
            return tb
        tb -= 8
    return n_rows  # fallback: single block


@jax.jit
def positional_encoding_forward(x: jnp.ndarray, pe: jnp.ndarray) -> jnp.ndarray:
    """x: (B, S, D); pe: (1, S, D) -> (B, S, D).  Semantics: x + pe (broadcast over B)."""
    B, S, D = x.shape
    assert pe.shape == (1, S, D)
    L = S * D  # lane-dense last dim (multiple of 128 for S=128 regardless of D)

    x2 = x.reshape(B, L)
    pe2 = pe.astype(x.dtype).reshape(1, L)

    tb = _pick_row_block(B, L, jnp.dtype(x.dtype).itemsize)
    grid = (B // tb,)

    out2 = pl.pallas_call(
        _add_pe_kernel,
        out_shape=jax.ShapeDtypeStruct((B, L), x.dtype),
        grid_spec=pltpu.PrefetchScalarGridSpec(
            num_scalar_prefetch=0,
            grid=grid,
            in_specs=[
                pl.BlockSpec((tb, L), lambda r: (r, 0)),   # x: one row-block per step
                pl.BlockSpec((1, L), lambda r: (0, 0)),    # pe: fetched once, VMEM-resident
            ],
            out_specs=pl.BlockSpec((tb, L), lambda r: (r, 0)),
        ),
        input_output_aliases={0: 0},                       # write result in place of x slab
        compiler_params=pltpu.CompilerParams(
            dimension_semantics=("parallel",),
        ),
    )(x2, pe2)

    return out2.reshape(B, S, D)


if __name__ == "__main__":
    # Small shapes consistent with the module: attn_size=32, sample=128, batch=2.
    attn_size = 32
    sample = 128
    batch = 2

    key = jax.random.PRNGKey(0)
    x = jax.random.normal(key, (batch, sample, attn_size), dtype=jnp.float32)
    pe = make_sine_pe(attn_size, sample)

    # Reference (same semantics as torch: x + self.pe), computed before the
    # kernel call since the kernel aliases its (internal) input slab.
    ref = x + pe

    out = positional_encoding_forward(x, pe)
    out = jax.block_until_ready(out)

    assert out.shape == (batch, sample, attn_size)
    assert jnp.allclose(out, ref, atol=1e-6), "mismatch vs reference"

    print("KERNEL_OK")
</pallas_src>

<mosaic_0001>
module attributes {stable_mosaic.version = 11 : i64} {
  func.func @_add_pe_kernel(%arg0: i32, %arg1: memref<2x4096xf32, #tpu.memory_space<vmem>>, %arg2: memref<1x4096xf32, #tpu.memory_space<vmem>>, %arg3: memref<2x4096xf32, #tpu.memory_space<vmem>>) attributes {dimension_semantics = [#tpu.dimension_semantics<parallel>], iteration_bounds = array<i64: 1>, scalar_prefetch = 0 : i64, scratch_operands = 0 : i64, tpu.core_type = #tpu.core_type<tc>, window_params = [{transform_indices = @transform_0, window_bounds = array<i64: 2, 4096>}, {pipeline_mode = #tpu.pipeline_mode<synchronous>, transform_indices = @transform_1, window_bounds = array<i64: 1, 4096>}, {transform_indices = @transform_2, window_bounds = array<i64: 2, 4096>}]} {
    %c0 = arith.constant 0 : index
    %c0_0 = arith.constant 0 : index
    %0 = vector.load %arg1[%c0, %c0_0] : memref<2x4096xf32, #tpu.memory_space<vmem>>, vector<2x4096xf32>
    %c0_1 = arith.constant 0 : index
    %c0_2 = arith.constant 0 : index
    %1 = vector.load %arg2[%c0_1, %c0_2] : memref<1x4096xf32, #tpu.memory_space<vmem>>, vector<1x4096xf32>
    %2 = vector.broadcast %1 : vector<1x4096xf32> to vector<2x4096xf32>
    %3 = arith.addf %0, %2 : vector<2x4096xf32>
    %c0_3 = arith.constant 0 : index
    %c0_4 = arith.constant 0 : index
    %4 = vector.load %arg3[%c0_3, %c0_4] : memref<2x4096xf32, #tpu.memory_space<vmem>>, vector<2x4096xf32>
    tpu.vector_store %arg3[%c0_3, %c0_4], %3 {strides = array<i32>} : memref<2x4096xf32, #tpu.memory_space<vmem>>, vector<2x4096xf32>,
    return
  }
  func.func @transform_0(%arg0: i32) -> (i32, i32) {
    %c0_i32 = arith.constant 0 : i32
    %c0_i32_0 = arith.constant 0 : i32
    return %arg0, %c0_i32 : i32, i32
  }
  func.func @transform_1(%arg0: i32) -> (i32, i32) {
    %c0_i32 = arith.constant 0 : i32
    %c0_i32_0 = arith.constant 0 : i32
    %c0_i32_1 = arith.constant 0 : i32
    return %c0_i32, %c0_i32_0 : i32, i32
  }
  func.func @transform_2(%arg0: i32) -> (i32, i32) {
    %c0_i32 = arith.constant 0 : i32
    %c0_i32_0 = arith.constant 0 : i32
    return %arg0, %c0_i32 : i32, i32
  }
}

</mosaic_0001>

<llo_original>
// kernel: positional_encoding_forward.1
$region0: #{positional_encoding_forward.1}
  #allocation0 [shape = 'u32[]', space=smem, size = 0x4, offset = 0x4, fixed_abs, tag = 'smem constant byte address 0x4 - core index']
  #allocation1 [shape = 'u32[72,128]{1,0:T(1,128)}', space=vmem, size = 0x9000, scoped, tag = 'internal scratch']
  %s0 = inlined_call_operand.vmem [shape: f32[2,4096], index: 0, kind: input, shape index: {}, may-alias: {0,2}]
  %s1 = inlined_call_operand.vmem [shape: f32[1,4096], index: 1, kind: input, shape index: {}]
  %s2 = inlined_call_operand.vmem [shape: f32[2,4096], index: 2, kind: output, shape index: {}, may-alias: {0,2}]
  %s3 = sld [smem:[#allocation0]]
  $region18: #{positional_encoding_forward.1} parent=0
    _
  %s5 = ssub.s32 1, %s3
  %s6 = scalar_select 0, %s5, %s3
  // Predicated region
  $region2: #{positional_encoding_forward.1} parent=0 // pred_check
    _
  $region3: #{positional_encoding_forward.1} parent=0 // pred_check_branch
    %8 = sbr.rel (0) target = $region5
  $region4: #{positional_encoding_forward.1} parent=0 // pred_region
    _
  $region5: #{positional_encoding_forward.1} parent=0 // pred_fallthru
    _
  // Predicated region
  $region6: #{positional_encoding_forward.1} parent=0 // pred_check
    _
  $region7: #{positional_encoding_forward.1} parent=0 // pred_check_branch
    %10 = sbr.rel (0) target = $region9
  $region8: #{positional_encoding_forward.1} parent=0 // pred_region
    _
  $region9: #{positional_encoding_forward.1} parent=0 // pred_fallthru
    _
  %v11 = vld [vmem:[%s0] sm:$0xff]
  %v12 = vld [vmem:[%s0 + $0x8] sm:$0xff]
  %v13 = vld [vmem:[%s0 + $0x10] sm:$0xff]
  %v14 = vld [vmem:[%s0 + $0x18] sm:$0xff]
  %v15 = vld [vmem:[%s0 + $0x20] sm:$0xff]
  %v16 = vld [vmem:[%s0 + $0x28] sm:$0xff]
  %v17 = vld [vmem:[%s0 + $0x30] sm:$0xff]
  %v18 = vld [vmem:[%s0 + $0x38] sm:$0xff]
  %v19 = vld [vmem:[%s1] sm:$0xff]
  %v20 = vld [vmem:[%s1 + $0x8] sm:$0xff]
  %v21 = vld [vmem:[%s1 + $0x10] sm:$0xff]
  %v22 = vld [vmem:[%s1 + $0x18] sm:$0xff]
  %v27 = vperm.slane %v19, 0
  %v28 = vperm.slane %v19, 1
  %v29 = vperm.slane %v19, 2
  %v30 = vperm.slane %v19, 3
  %v31 = vperm.slane %v19, 4
  %v32 = vperm.slane %v19, 5
  %v33 = vperm.slane %v19, 6
  %v34 = vperm.slane %v19, 7
  %v35 = vperm.slane %v20, 0
  %v36 = vperm.slane %v20, 1
  %v37 = vperm.slane %v20, 2
  %v38 = vperm.slane %v20, 3
  %v39 = vperm.slane %v20, 4
  %v40 = vperm.slane %v20, 5
  %v41 = vperm.slane %v20, 6
  %v42 = vperm.slane %v20, 7
  %v43 = vperm.slane %v21, 0
  %v44 = vperm.slane %v21, 1
  %v45 = vperm.slane %v21, 2
  %v46 = vperm.slane %v21, 3
  %v47 = vperm.slane %v21, 4
  %v48 = vperm.slane %v21, 5
  %v49 = vperm.slane %v21, 6
  %v50 = vperm.slane %v21, 7
  %v51 = vperm.slane %v22, 0
  %v52 = vperm.slane %v22, 1
  %v53 = vperm.slane %v22, 2
  %v54 = vperm.slane %v22, 3
  %v55 = vperm.slane %v22, 4
  %v56 = vperm.slane %v22, 5
  %v57 = vperm.slane %v22, 6
  %v58 = vperm.slane %v22, 7
  %v59 = vrot.slane %v28, 6
  %v60 = vrot.slane %v29, 4
  %v61 = vrot.slane %v30, 2
  %v62 = vrot.slane %v32, 6
  %v63 = vrot.slane %v33, 4
  %v64 = vrot.slane %v34, 2
  %v65 = vrot.slane %v36, 6
  %v66 = vrot.slane %v37, 4
  %v67 = vrot.slane %v38, 2
  %v68 = vrot.slane %v40, 6
  %v69 = vrot.slane %v41, 4
  %v70 = vrot.slane %v42, 2
  %v71 = vrot.slane %v44, 6
  %v72 = vrot.slane %v45, 4
  %v73 = vrot.slane %v46, 2
  %v74 = vrot.slane %v48, 6
  %v75 = vrot.slane %v49, 4
  %v76 = vrot.slane %v50, 2
  %v77 = vrot.slane %v52, 6
  %v78 = vrot.slane %v53, 4
  %v79 = vrot.slane %v54, 2
  %v80 = vrot.slane %v56, 6
  %v81 = vrot.slane %v57, 4
  %v82 = vrot.slane %v58, 2
  %vm83 = vcmask 1041408
  %v84 = vsel %vm83, %v27, %v59
  %vm85 = vcmask 1045508
  %v86 = vsel %vm85, %v60, %v61
  %vm87 = vcmask 1043456
  %v88 = vsel %vm87, %v84, %v86
  %v89 = vsel %vm83, %v31, %v62
  %v90 = vsel %vm85, %v63, %v64
  %v91 = vsel %vm87, %v89, %v90
  %v92 = vsel %vm83, %v35, %v65
  %v93 = vsel %vm85, %v66, %v67
  %v94 = vsel %vm87, %v92, %v93
  %v95 = vsel %vm83, %v39, %v68
  %v96 = vsel %vm85, %v69, %v70
  %v97 = vsel %vm87, %v95, %v96
  %v98 = vsel %vm83, %v43, %v71
  %v99 = vsel %vm85, %v72, %v73
  %v100 = vsel %vm87, %v98, %v99
  %v101 = vsel %vm83, %v47, %v74
  %v102 = vsel %vm85, %v75, %v76
  %v103 = vsel %vm87, %v101, %v102
  %v104 = vsel %vm83, %v51, %v77
  %v105 = vsel %vm85, %v78, %v79
  %v106 = vsel %vm87, %v104, %v105
  %v107 = vsel %vm83, %v55, %v80
  %v108 = vsel %vm85, %v81, %v82
  %v109 = vsel %vm87, %v107, %v108
  %v118 = vadd.f32 %v11, %v88
  %v119 = vadd.f32 %v12, %v91
  %v120 = vadd.f32 %v13, %v94
  %v121 = vadd.f32 %v14, %v97
  %v122 = vadd.f32 %v15, %v100
  %v123 = vadd.f32 %v16, %v103
  %v124 = vadd.f32 %v17, %v106
  %v125 = vadd.f32 %v18, %v109
  %126 = vst [vmem:[%s2] sm:$0xff] %v118
  %127 = vst [vmem:[%s2 + $0x8] sm:$0xff] %v119
  %128 = vst [vmem:[%s2 + $0x10] sm:$0xff] %v120
  %129 = vst [vmem:[%s2 + $0x18] sm:$0xff] %v121
  %130 = vst [vmem:[%s2 + $0x20] sm:$0xff] %v122
  %131 = vst [vmem:[%s2 + $0x28] sm:$0xff] %v123
  %132 = vst [vmem:[%s2 + $0x30] sm:$0xff] %v124
  %133 = vst [vmem:[%s2 + $0x38] sm:$0xff] %v125
  // Predicated region
  $region10: #{positional_encoding_forward.1} parent=0 // pred_check
    _
  $region11: #{positional_encoding_forward.1} parent=0 // pred_check_branch
    %135 = sbr.rel (0) target = $region13
  $region12: #{positional_encoding_forward.1} parent=0 // pred_region
    _
  $region13: #{positional_encoding_forward.1} parent=0 // pred_fallthru
    _
  // Predicated region
  $region14: #{positional_encoding_forward.1} parent=0 // pred_check
    _
  $region15: #{positional_encoding_forward.1} parent=0 // pred_check_branch
    %137 = sbr.rel (0) target = $region17
  $region16: #{positional_encoding_forward.1} parent=0 // pred_region
    _
  $region17: #{positional_encoding_forward.1} parent=0 // pred_fallthru
    _

</llo_original>
